<compile_context>
chip_gen: v7x
topology: tpu7x:2x2x1
jax: 0.10.0
libtpu: 0.0.40
codegen_flags: <defaults>
</compile_context>

<pallas_src>
import functools

import jax
import jax.numpy as jnp
from jax import lax
from jax.experimental import pallas as pl
from jax.experimental.pallas import tpu as pltpu

# Keep the resident set comfortably inside v7x's 64 MiB/TC VMEM while raising
# v5e's 16 MiB / v6e's 32 MiB default scoped limit.
_VMEM_LIMIT_BYTES = 48 * 1024 * 1024


def _pick_tile(n, target):
    """Largest tile <= target that divides n and is sublane (8) aligned."""
    if n <= target:
        return n
    for t in range(min(target, n), 7, -1):
        if n % t == 0 and t % 8 == 0:
            return t
    return n  # ragged n: fall back to the full axis (always a legal block)


def _qkv_proj_kernel(x_ref, w_ref, q_ref, k_ref, v_ref, *, heads, dim_head):
    # x_ref : (1, TP, D)      rows of the current batch element
    # w_ref : (3D, D)         fused QKV weight, scale pre-folded into Q rows
    # q/k/v : (1, H, TP, dh)  head-major, lane-dense per-head slabs
    x = x_ref[0]                                   # (TP, D)
    w = w_ref[...]                                 # (3D, D)
    d_model = heads * dim_head

    # x @ W^T with the transpose folded into the MXU contraction dims.
    qkv = lax.dot_general(x, w, (((1,), (1,)), ((), ())),
                          preferred_element_type=jnp.float32)  # (TP, 3D) f32
    # Early cast to the compute dtype (halves the live intermediate for bf16).
    qkv = qkv.astype(q_ref.dtype)

    # Head split happens once here, outside the O(N^2) attention loop.
    for h in range(heads):                         # static unroll; heads small
        hs = h * dim_head
        q_ref[0, h] = qkv[:, hs:hs + dim_head]
        k_ref[0, h] = qkv[:, d_model + hs:d_model + hs + dim_head]
        v_ref[0, h] = qkv[:, 2 * d_model + hs:2 * d_model + hs + dim_head]


def _flash_attn_kernel(q_ref, k_ref, v_ref, o_ref, m_sc, l_sc, acc_sc, *,
                       heads, dim_head, approx_recip):
    # q_ref : (1, H, TQ, dh)    k_ref / v_ref : (1, H, TK, dh)
    # o_ref : (1, TQ, H*dh)
    # m_sc/l_sc : (H, TQ, 1) f32 ; acc_sc : (H, TQ, dh) f32
    ki = pl.program_id(2)

    @pl.when(ki == 0)
    def _init():
        m_sc[...] = jnp.full(m_sc.shape, -jnp.inf, dtype=m_sc.dtype)
        l_sc[...] = jnp.zeros(l_sc.shape, dtype=l_sc.dtype)
        acc_sc[...] = jnp.zeros(acc_sc.shape, dtype=acc_sc.dtype)

    q = q_ref[0]                                   # (H, TQ, dh) compute dtype
    k = k_ref[0]                                   # (H, TK, dh)
    v = v_ref[0]                                   # (H, TK, dh)

    # q @ k^T for all heads; the transpose folds into the MXU operand.
    s = jnp.einsum("hqd,hkd->hqk", q, k,
                   preferred_element_type=jnp.float32)          # (H, TQ, TK)

    # Online (flash) softmax update; statistics stay in f32.
    m_prev = m_sc[...]
    m_new = jnp.maximum(m_prev, jnp.max(s, axis=-1, keepdims=True))
    alpha = jnp.exp(m_prev - m_new)                              # (H, TQ, 1)
    p = jnp.exp(s - m_new)                                       # (H, TQ, TK)
    l_sc[...] = alpha * l_sc[...] + jnp.sum(p, axis=-1, keepdims=True)
    acc_sc[...] = alpha * acc_sc[...] + jnp.einsum(
        "hqk,hkd->hqd", p.astype(v.dtype), v,
        preferred_element_type=jnp.float32)
    m_sc[...] = m_new

    @pl.when(ki == pl.num_programs(2) - 1)
    def _finalize():
        inv = pl.reciprocal(l_sc[...], approx=approx_recip)      # (H, TQ, 1)
        out = acc_sc[...] * inv                                  # (H, TQ, dh)
        if dim_head % 128 == 0:
            # Lane-aligned per-head stores: no concat, unmasked vst.
            for h in range(heads):
                o_ref[0, :, h * dim_head:(h + 1) * dim_head] = (
                    out[h].astype(o_ref.dtype))
        else:
            # 'b h n d -> b n (h d)' in-register; one lane-dense store.
            o_ref[0] = jnp.concatenate(
                [out[h] for h in range(heads)], axis=-1).astype(o_ref.dtype)


def unified_cross_attention(x, w_qkv, *, heads, q_tile=256, kv_tile=512,
                            approx_recip=True):
    """
    x     : [B, N, D]
    w_qkv : [3*D, D]  (PyTorch nn.Linear(dim, 3*dim, bias=False).weight layout)
    returns [B, N, D] == UnifiedCrossAttention(dim=D, heads=heads)(x)  (eval)
    """
    B, N, D = x.shape
    assert D % heads == 0
    dh = D // heads
    scale = dh ** -0.5

    # Fold the softmax scale into the Q rows of the weight (O(D^2), off the
    # per-token path) so the kernels never multiply by `scale`.
    row_scale = jnp.concatenate(
        [jnp.full((D,), scale, dtype=w_qkv.dtype),
         jnp.ones((2 * D,), dtype=w_qkv.dtype)])
    w = (w_qkv * row_scale[:, None]).astype(w_qkv.dtype)

    tp = _pick_tile(N, q_tile)       # projection row tile
    tq = _pick_tile(N, q_tile)       # attention query tile
    tk = _pick_tile(N, kv_tile)      # attention kv tile

    # ---- Pass 1: fused QKV projection, head-major outputs ------------------
    proj_kernel = functools.partial(_qkv_proj_kernel, heads=heads, dim_head=dh)
    qkv_spec = pl.BlockSpec((1, heads, tp, dh), lambda b, i: (b, 0, i, 0))
    q, k, v = pl.pallas_call(
        proj_kernel,
        out_shape=tuple(jax.ShapeDtypeStruct((B, heads, N, dh), x.dtype)
                        for _ in range(3)),
        grid_spec=pltpu.PrefetchScalarGridSpec(
            num_scalar_prefetch=0,
            grid=(B, N // tp),
            in_specs=[
                pl.BlockSpec((1, tp, D), lambda b, i: (b, i, 0)),
                pl.BlockSpec((3 * D, D), lambda b, i: (0, 0)),
            ],
            out_specs=(qkv_spec, qkv_spec, qkv_spec),
        ),
        compiler_params=pltpu.CompilerParams(
            dimension_semantics=("parallel", "parallel"),
            vmem_limit_bytes=_VMEM_LIMIT_BYTES),
    )(x, w)

    # ---- Pass 2: flash attention over (batch, q tiles, kv tiles) -----------
    attn_kernel = functools.partial(_flash_attn_kernel, heads=heads,
                                    dim_head=dh, approx_recip=approx_recip)
    out = pl.pallas_call(
        attn_kernel,
        out_shape=jax.ShapeDtypeStruct((B, N, D), x.dtype),
        grid_spec=pltpu.PrefetchScalarGridSpec(
            num_scalar_prefetch=0,
            grid=(B, N // tq, N // tk),          # kv (reduction) axis last
            in_specs=[
                pl.BlockSpec((1, heads, tq, dh),
                             lambda b, qi, ki: (b, 0, qi, 0)),
                pl.BlockSpec((1, heads, tk, dh),
                             lambda b, qi, ki: (b, 0, ki, 0)),
                pl.BlockSpec((1, heads, tk, dh),
                             lambda b, qi, ki: (b, 0, ki, 0)),
            ],
            out_specs=pl.BlockSpec((1, tq, D), lambda b, qi, ki: (b, qi, 0)),
            scratch_shapes=[
                pltpu.VMEM((heads, tq, 1), jnp.float32),   # running max  m
                pltpu.VMEM((heads, tq, 1), jnp.float32),   # running sum  l
                pltpu.VMEM((heads, tq, dh), jnp.float32),  # unnormalized acc
            ]),
        compiler_params=pltpu.CompilerParams(
            dimension_semantics=("parallel", "parallel", "arbitrary"),
            vmem_limit_bytes=_VMEM_LIMIT_BYTES),
    )(q, k, v)
    return out


def _reference(x, w_qkv, heads):
    B, N, D = x.shape
    dh = D // heads
    qkv = jnp.einsum("bnd,ed->bne", x, w_qkv)          # x @ W^T -> (B, N, 3D)
    q, k, v = jnp.split(qkv, 3, axis=-1)

    def rh(t):
        return jnp.transpose(t.reshape(B, N, heads, dh), (0, 2, 1, 3))

    q, k, v = rh(q), rh(k), rh(v)
    dots = jnp.einsum("bhnd,bhmd->bhnm", q, k) * (dh ** -0.5)
    attn = jax.nn.softmax(dots, axis=-1)
    out = jnp.einsum("bhnm,bhmd->bhnd", attn, v)
    return jnp.transpose(out, (0, 2, 1, 3)).reshape(B, N, D)


if __name__ == "__main__":
    # Small shapes consistent with the module: batch=2, seq=8, dim=32, heads=8.
    B, N, D, heads = 2, 8, 32, 8
    key = jax.random.PRNGKey(0)
    kx, kw = jax.random.split(key)
    x = jax.random.normal(kx, (B, N, D), dtype=jnp.float32)
    # Deterministic to_qkv weight, shape (3*D, D) like nn.Linear.weight
    w_qkv = jax.random.normal(kw, (3 * D, D), dtype=jnp.float32) * (D ** -0.5)

    out = jax.block_until_ready(unified_cross_attention(x, w_qkv, heads=heads))
    ref = _reference(x, w_qkv, heads)
    assert out.shape == (B, N, D)
    # Approximate EUP reciprocal + fp reassociation in the online softmax:
    # compare at a relaxed (bf16-ish) tolerance rather than exact-f32 1e-4.
    assert jnp.allclose(out, ref, atol=1e-2, rtol=1e-2), "mismatch vs reference"

    # Second check exercising the multi-tile online-softmax path
    # (several q tiles and kv tiles per batch element).
    B2, N2, D2, H2 = 2, 256, 128, 4
    k1, k2 = jax.random.split(jax.random.PRNGKey(1))
    x2 = jax.random.normal(k1, (B2, N2, D2), dtype=jnp.float32)
    w2 = jax.random.normal(k2, (3 * D2, D2), dtype=jnp.float32) * (D2 ** -0.5)
    out2 = jax.block_until_ready(
        unified_cross_attention(x2, w2, heads=H2, q_tile=64, kv_tile=64))
    ref2 = _reference(x2, w2, H2)
    assert jnp.allclose(out2, ref2, atol=1e-2, rtol=1e-2), "mismatch (tiled)"

    print("KERNEL_OK")
</pallas_src>

<mosaic_0001>
module attributes {stable_mosaic.version = 11 : i64} {
  func.func @_qkv_proj_kernel(%arg0: i32, %arg1: i32, %arg2: memref<1x8x32xf32, #tpu.memory_space<vmem>>, %arg3: memref<96x32xf32, #tpu.memory_space<vmem>>, %arg4: memref<1x8x8x4xf32, #tpu.memory_space<vmem>>, %arg5: memref<1x8x8x4xf32, #tpu.memory_space<vmem>>, %arg6: memref<1x8x8x4xf32, #tpu.memory_space<vmem>>) attributes {dimension_semantics = [#tpu.dimension_semantics<parallel>, #tpu.dimension_semantics<parallel>], iteration_bounds = array<i64: 2, 1>, scalar_prefetch = 0 : i64, scratch_operands = 0 : i64, tpu.core_type = #tpu.core_type<tc>, window_params = [{transform_indices = @transform_0, window_bounds = array<i64: 1, 8, 32>}, {pipeline_mode = #tpu.pipeline_mode<synchronous>, transform_indices = @transform_1, window_bounds = array<i64: 96, 32>}, {transform_indices = @transform_2, window_bounds = array<i64: 1, 8, 8, 4>}, {transform_indices = @transform_3, window_bounds = array<i64: 1, 8, 8, 4>}, {transform_indices = @transform_4, window_bounds = array<i64: 1, 8, 8, 4>}]} {
    %c0 = arith.constant 0 : index
    %c0_0 = arith.constant 0 : index
    %c0_1 = arith.constant 0 : index
    %0 = vector.load %arg2[%c0, %c0_0, %c0_1] : memref<1x8x32xf32, #tpu.memory_space<vmem>>, vector<1x8x32xf32>
    %1 = vector.shape_cast %0 : vector<1x8x32xf32> to vector<8x32xf32>
    %c0_2 = arith.constant 0 : index
    %c0_3 = arith.constant 0 : index
    %2 = vector.load %arg3[%c0_2, %c0_3] : memref<96x32xf32, #tpu.memory_space<vmem>>, vector<96x32xf32>
    %cst = arith.constant dense<0.000000e+00> : vector<8x96xf32>
    %3 = tpu.matmul %1, %2, %cst {dimension_numbers = #tpu.dot_dimension_numbers<[1], [1], [0], [0], [0, 0, 1, 0], [], []>} : vector<8x32xf32>, vector<96x32xf32>, vector<8x96xf32> -> vector<8x96xf32>
    %4 = vector.extract_strided_slice %3 {offsets = [0, 0], sizes = [8, 4], strides = [1, 1]} : vector<8x96xf32> to vector<8x4xf32>
    %c0_4 = arith.constant 0 : index
    %c0_5 = arith.constant 0 : index
    %c0_6 = arith.constant 0 : index
    %c0_7 = arith.constant 0 : index
    %5 = vector.load %arg4[%c0_4, %c0_5, %c0_6, %c0_7] : memref<1x8x8x4xf32, #tpu.memory_space<vmem>>, vector<1x1x8x4xf32>
    %6 = vector.shape_cast %5 : vector<1x1x8x4xf32> to vector<8x4xf32>
    %7 = vector.shape_cast %4 : vector<8x4xf32> to vector<1x1x8x4xf32>
    tpu.vector_store %arg4[%c0_4, %c0_5, %c0_6, %c0_7], %7 {strides = array<i32>} : memref<1x8x8x4xf32, #tpu.memory_space<vmem>>, vector<1x1x8x4xf32>,
    %8 = vector.extract_strided_slice %3 {offsets = [0, 32], sizes = [8, 4], strides = [1, 1]} : vector<8x96xf32> to vector<8x4xf32>
    %c0_8 = arith.constant 0 : index
    %c0_9 = arith.constant 0 : index
    %c0_10 = arith.constant 0 : index
    %c0_11 = arith.constant 0 : index
    %9 = vector.load %arg5[%c0_8, %c0_9, %c0_10, %c0_11] : memref<1x8x8x4xf32, #tpu.memory_space<vmem>>, vector<1x1x8x4xf32>
    %10 = vector.shape_cast %9 : vector<1x1x8x4xf32> to vector<8x4xf32>
    %11 = vector.shape_cast %8 : vector<8x4xf32> to vector<1x1x8x4xf32>
    tpu.vector_store %arg5[%c0_8, %c0_9, %c0_10, %c0_11], %11 {strides = array<i32>} : memref<1x8x8x4xf32, #tpu.memory_space<vmem>>, vector<1x1x8x4xf32>,
    %12 = vector.extract_strided_slice %3 {offsets = [0, 64], sizes = [8, 4], strides = [1, 1]} : vector<8x96xf32> to vector<8x4xf32>
    %c0_12 = arith.constant 0 : index
    %c0_13 = arith.constant 0 : index
    %c0_14 = arith.constant 0 : index
    %c0_15 = arith.constant 0 : index
    %13 = vector.load %arg6[%c0_12, %c0_13, %c0_14, %c0_15] : memref<1x8x8x4xf32, #tpu.memory_space<vmem>>, vector<1x1x8x4xf32>
    %14 = vector.shape_cast %13 : vector<1x1x8x4xf32> to vector<8x4xf32>
    %15 = vector.shape_cast %12 : vector<8x4xf32> to vector<1x1x8x4xf32>
    tpu.vector_store %arg6[%c0_12, %c0_13, %c0_14, %c0_15], %15 {strides = array<i32>} : memref<1x8x8x4xf32, #tpu.memory_space<vmem>>, vector<1x1x8x4xf32>,
    %16 = vector.extract_strided_slice %3 {offsets = [0, 4], sizes = [8, 4], strides = [1, 1]} : vector<8x96xf32> to vector<8x4xf32>
    %c0_16 = arith.constant 0 : index
    %c1 = arith.constant 1 : index
    %c0_17 = arith.constant 0 : index
    %c0_18 = arith.constant 0 : index
    %17 = vector.load %arg4[%c0_16, %c1, %c0_17, %c0_18] : memref<1x8x8x4xf32, #tpu.memory_space<vmem>>, vector<1x1x8x4xf32>
    %18 = vector.shape_cast %17 : vector<1x1x8x4xf32> to vector<8x4xf32>
    %19 = vector.shape_cast %16 : vector<8x4xf32> to vector<1x1x8x4xf32>
    tpu.vector_store %arg4[%c0_16, %c1, %c0_17, %c0_18], %19 {strides = array<i32>} : memref<1x8x8x4xf32, #tpu.memory_space<vmem>>, vector<1x1x8x4xf32>,
    %20 = vector.extract_strided_slice %3 {offsets = [0, 36], sizes = [8, 4], strides = [1, 1]} : vector<8x96xf32> to vector<8x4xf32>
    %c0_19 = arith.constant 0 : index
    %c1_20 = arith.constant 1 : index
    %c0_21 = arith.constant 0 : index
    %c0_22 = arith.constant 0 : index
    %21 = vector.load %arg5[%c0_19, %c1_20, %c0_21, %c0_22] : memref<1x8x8x4xf32, #tpu.memory_space<vmem>>, vector<1x1x8x4xf32>
    %22 = vector.shape_cast %21 : vector<1x1x8x4xf32> to vector<8x4xf32>
    %23 = vector.shape_cast %20 : vector<8x4xf32> to vector<1x1x8x4xf32>
    tpu.vector_store %arg5[%c0_19, %c1_20, %c0_21, %c0_22], %23 {strides = array<i32>} : memref<1x8x8x4xf32, #tpu.memory_space<vmem>>, vector<1x1x8x4xf32>,
    %24 = vector.extract_strided_slice %3 {offsets = [0, 68], sizes = [8, 4], strides = [1, 1]} : vector<8x96xf32> to vector<8x4xf32>
    %c0_23 = arith.constant 0 : index
    %c1_24 = arith.constant 1 : index
    %c0_25 = arith.constant 0 : index
    %c0_26 = arith.constant 0 : index
    %25 = vector.load %arg6[%c0_23, %c1_24, %c0_25, %c0_26] : memref<1x8x8x4xf32, #tpu.memory_space<vmem>>, vector<1x1x8x4xf32>
    %26 = vector.shape_cast %25 : vector<1x1x8x4xf32> to vector<8x4xf32>
    %27 = vector.shape_cast %24 : vector<8x4xf32> to vector<1x1x8x4xf32>
    tpu.vector_store %arg6[%c0_23, %c1_24, %c0_25, %c0_26], %27 {strides = array<i32>} : memref<1x8x8x4xf32, #tpu.memory_space<vmem>>, vector<1x1x8x4xf32>,
    %28 = vector.extract_strided_slice %3 {offsets = [0, 8], sizes = [8, 4], strides = [1, 1]} : vector<8x96xf32> to vector<8x4xf32>
    %c0_27 = arith.constant 0 : index
    %c2 = arith.constant 2 : index
    %c0_28 = arith.constant 0 : index
    %c0_29 = arith.constant 0 : index
    %29 = vector.load %arg4[%c0_27, %c2, %c0_28, %c0_29] : memref<1x8x8x4xf32, #tpu.memory_space<vmem>>, vector<1x1x8x4xf32>
    %30 = vector.shape_cast %29 : vector<1x1x8x4xf32> to vector<8x4xf32>
    %31 = vector.shape_cast %28 : vector<8x4xf32> to vector<1x1x8x4xf32>
    tpu.vector_store %arg4[%c0_27, %c2, %c0_28, %c0_29], %31 {strides = array<i32>} : memref<1x8x8x4xf32, #tpu.memory_space<vmem>>, vector<1x1x8x4xf32>,
    %32 = vector.extract_strided_slice %3 {offsets = [0, 40], sizes = [8, 4], strides = [1, 1]} : vector<8x96xf32> to vector<8x4xf32>
    %c0_30 = arith.constant 0 : index
    %c2_31 = arith.constant 2 : index
    %c0_32 = arith.constant 0 : index
    %c0_33 = arith.constant 0 : index
    %33 = vector.load %arg5[%c0_30, %c2_31, %c0_32, %c0_33] : memref<1x8x8x4xf32, #tpu.memory_space<vmem>>, vector<1x1x8x4xf32>
    %34 = vector.shape_cast %33 : vector<1x1x8x4xf32> to vector<8x4xf32>
    %35 = vector.shape_cast %32 : vector<8x4xf32> to vector<1x1x8x4xf32>
    tpu.vector_store %arg5[%c0_30, %c2_31, %c0_32, %c0_33], %35 {strides = array<i32>} : memref<1x8x8x4xf32, #tpu.memory_space<vmem>>, vector<1x1x8x4xf32>,
    %36 = vector.extract_strided_slice %3 {offsets = [0, 72], sizes = [8, 4], strides = [1, 1]} : vector<8x96xf32> to vector<8x4xf32>
    %c0_34 = arith.constant 0 : index
    %c2_35 = arith.constant 2 : index
    %c0_36 = arith.constant 0 : index
    %c0_37 = arith.constant 0 : index
    %37 = vector.load %arg6[%c0_34, %c2_35, %c0_36, %c0_37] : memref<1x8x8x4xf32, #tpu.memory_space<vmem>>, vector<1x1x8x4xf32>
    %38 = vector.shape_cast %37 : vector<1x1x8x4xf32> to vector<8x4xf32>
    %39 = vector.shape_cast %36 : vector<8x4xf32> to vector<1x1x8x4xf32>
    tpu.vector_store %arg6[%c0_34, %c2_35, %c0_36, %c0_37], %39 {strides = array<i32>} : memref<1x8x8x4xf32, #tpu.memory_space<vmem>>, vector<1x1x8x4xf32>,
    %40 = vector.extract_strided_slice %3 {offsets = [0, 12], sizes = [8, 4], strides = [1, 1]} : vector<8x96xf32> to vector<8x4xf32>
    %c0_38 = arith.constant 0 : index
    %c3 = arith.constant 3 : index
    %c0_39 = arith.constant 0 : index
    %c0_40 = arith.constant 0 : index
    %41 = vector.load %arg4[%c0_38, %c3, %c0_39, %c0_40] : memref<1x8x8x4xf32, #tpu.memory_space<vmem>>, vector<1x1x8x4xf32>
    %42 = vector.shape_cast %41 : vector<1x1x8x4xf32> to vector<8x4xf32>
    %43 = vector.shape_cast %40 : vector<8x4xf32> to vector<1x1x8x4xf32>
    tpu.vector_store %arg4[%c0_38, %c3, %c0_39, %c0_40], %43 {strides = array<i32>} : memref<1x8x8x4xf32, #tpu.memory_space<vmem>>, vector<1x1x8x4xf32>,
    %44 = vector.extract_strided_slice %3 {offsets = [0, 44], sizes = [8, 4], strides = [1, 1]} : vector<8x96xf32> to vector<8x4xf32>
    %c0_41 = arith.constant 0 : index
    %c3_42 = arith.constant 3 : index
    %c0_43 = arith.constant 0 : index
    %c0_44 = arith.constant 0 : index
    %45 = vector.load %arg5[%c0_41, %c3_42, %c0_43, %c0_44] : memref<1x8x8x4xf32, #tpu.memory_space<vmem>>, vector<1x1x8x4xf32>
    %46 = vector.shape_cast %45 : vector<1x1x8x4xf32> to vector<8x4xf32>
    %47 = vector.shape_cast %44 : vector<8x4xf32> to vector<1x1x8x4xf32>
    tpu.vector_store %arg5[%c0_41, %c3_42, %c0_43, %c0_44], %47 {strides = array<i32>} : memref<1x8x8x4xf32, #tpu.memory_space<vmem>>, vector<1x1x8x4xf32>,
    %48 = vector.extract_strided_slice %3 {offsets = [0, 76], sizes = [8, 4], strides = [1, 1]} : vector<8x96xf32> to vector<8x4xf32>
    %c0_45 = arith.constant 0 : index
    %c3_46 = arith.constant 3 : index
    %c0_47 = arith.constant 0 : index
    %c0_48 = arith.constant 0 : index
    %49 = vector.load %arg6[%c0_45, %c3_46, %c0_47, %c0_48] : memref<1x8x8x4xf32, #tpu.memory_space<vmem>>, vector<1x1x8x4xf32>
    %50 = vector.shape_cast %49 : vector<1x1x8x4xf32> to vector<8x4xf32>
    %51 = vector.shape_cast %48 : vector<8x4xf32> to vector<1x1x8x4xf32>
    tpu.vector_store %arg6[%c0_45, %c3_46, %c0_47, %c0_48], %51 {strides = array<i32>} : memref<1x8x8x4xf32, #tpu.memory_space<vmem>>, vector<1x1x8x4xf32>,
    %52 = vector.extract_strided_slice %3 {offsets = [0, 16], sizes = [8, 4], strides = [1, 1]} : vector<8x96xf32> to vector<8x4xf32>
    %c0_49 = arith.constant 0 : index
    %c4 = arith.constant 4 : index
    %c0_50 = arith.constant 0 : index
    %c0_51 = arith.constant 0 : index
    %53 = vector.load %arg4[%c0_49, %c4, %c0_50, %c0_51] : memref<1x8x8x4xf32, #tpu.memory_space<vmem>>, vector<1x1x8x4xf32>
    %54 = vector.shape_cast %53 : vector<1x1x8x4xf32> to vector<8x4xf32>
    %55 = vector.shape_cast %52 : vector<8x4xf32> to vector<1x1x8x4xf32>
    tpu.vector_store %arg4[%c0_49, %c4, %c0_50, %c0_51], %55 {strides = array<i32>} : memref<1x8x8x4xf32, #tpu.memory_space<vmem>>, vector<1x1x8x4xf32>,
    %56 = vector.extract_strided_slice %3 {offsets = [0, 48], sizes = [8, 4], strides = [1, 1]} : vector<8x96xf32> to vector<8x4xf32>
    %c0_52 = arith.constant 0 : index
    %c4_53 = arith.constant 4 : index
    %c0_54 = arith.constant 0 : index
    %c0_55 = arith.constant 0 : index
    %57 = vector.load %arg5[%c0_52, %c4_53, %c0_54, %c0_55] : memref<1x8x8x4xf32, #tpu.memory_space<vmem>>, vector<1x1x8x4xf32>
    %58 = vector.shape_cast %57 : vector<1x1x8x4xf32> to vector<8x4xf32>
    %59 = vector.shape_cast %56 : vector<8x4xf32> to vector<1x1x8x4xf32>
    tpu.vector_store %arg5[%c0_52, %c4_53, %c0_54, %c0_55], %59 {strides = array<i32>} : memref<1x8x8x4xf32, #tpu.memory_space<vmem>>, vector<1x1x8x4xf32>,
    %60 = vector.extract_strided_slice %3 {offsets = [0, 80], sizes = [8, 4], strides = [1, 1]} : vector<8x96xf32> to vector<8x4xf32>
    %c0_56 = arith.constant 0 : index
    %c4_57 = arith.constant 4 : index
    %c0_58 = arith.constant 0 : index
    %c0_59 = arith.constant 0 : index
    %61 = vector.load %arg6[%c0_56, %c4_57, %c0_58, %c0_59] : memref<1x8x8x4xf32, #tpu.memory_space<vmem>>, vector<1x1x8x4xf32>
    %62 = vector.shape_cast %61 : vector<1x1x8x4xf32> to vector<8x4xf32>
    %63 = vector.shape_cast %60 : vector<8x4xf32> to vector<1x1x8x4xf32>
    tpu.vector_store %arg6[%c0_56, %c4_57, %c0_58, %c0_59], %63 {strides = array<i32>} : memref<1x8x8x4xf32, #tpu.memory_space<vmem>>, vector<1x1x8x4xf32>,
    %64 = vector.extract_strided_slice %3 {offsets = [0, 20], sizes = [8, 4], strides = [1, 1]} : vector<8x96xf32> to vector<8x4xf32>
    %c0_60 = arith.constant 0 : index
    %c5 = arith.constant 5 : index
    %c0_61 = arith.constant 0 : index
    %c0_62 = arith.constant 0 : index
    %65 = vector.load %arg4[%c0_60, %c5, %c0_61, %c0_62] : memref<1x8x8x4xf32, #tpu.memory_space<vmem>>, vector<1x1x8x4xf32>
    %66 = vector.shape_cast %65 : vector<1x1x8x4xf32> to vector<8x4xf32>
    %67 = vector.shape_cast %64 : vector<8x4xf32> to vector<1x1x8x4xf32>
    tpu.vector_store %arg4[%c0_60, %c5, %c0_61, %c0_62], %67 {strides = array<i32>} : memref<1x8x8x4xf32, #tpu.memory_space<vmem>>, vector<1x1x8x4xf32>,
    %68 = vector.extract_strided_slice %3 {offsets = [0, 52], sizes = [8, 4], strides = [1, 1]} : vector<8x96xf32> to vector<8x4xf32>
    %c0_63 = arith.constant 0 : index
    %c5_64 = arith.constant 5 : index
    %c0_65 = arith.constant 0 : index
    %c0_66 = arith.constant 0 : index
    %69 = vector.load %arg5[%c0_63, %c5_64, %c0_65, %c0_66] : memref<1x8x8x4xf32, #tpu.memory_space<vmem>>, vector<1x1x8x4xf32>
    %70 = vector.shape_cast %69 : vector<1x1x8x4xf32> to vector<8x4xf32>
    %71 = vector.shape_cast %68 : vector<8x4xf32> to vector<1x1x8x4xf32>
    tpu.vector_store %arg5[%c0_63, %c5_64, %c0_65, %c0_66], %71 {strides = array<i32>} : memref<1x8x8x4xf32, #tpu.memory_space<vmem>>, vector<1x1x8x4xf32>,
    %72 = vector.extract_strided_slice %3 {offsets = [0, 84], sizes = [8, 4], strides = [1, 1]} : vector<8x96xf32> to vector<8x4xf32>
    %c0_67 = arith.constant 0 : index
    %c5_68 = arith.constant 5 : index
    %c0_69 = arith.constant 0 : index
    %c0_70 = arith.constant 0 : index
    %73 = vector.load %arg6[%c0_67, %c5_68, %c0_69, %c0_70] : memref<1x8x8x4xf32, #tpu.memory_space<vmem>>, vector<1x1x8x4xf32>
    %74 = vector.shape_cast %73 : vector<1x1x8x4xf32> to vector<8x4xf32>
    %75 = vector.shape_cast %72 : vector<8x4xf32> to vector<1x1x8x4xf32>
    tpu.vector_store %arg6[%c0_67, %c5_68, %c0_69, %c0_70], %75 {strides = array<i32>} : memref<1x8x8x4xf32, #tpu.memory_space<vmem>>, vector<1x1x8x4xf32>,
    %76 = vector.extract_strided_slice %3 {offsets = [0, 24], sizes = [8, 4], strides = [1, 1]} : vector<8x96xf32> to vector<8x4xf32>
    %c0_71 = arith.constant 0 : index
    %c6 = arith.constant 6 : index
    %c0_72 = arith.constant 0 : index
    %c0_73 = arith.constant 0 : index
    %77 = vector.load %arg4[%c0_71, %c6, %c0_72, %c0_73] : memref<1x8x8x4xf32, #tpu.memory_space<vmem>>, vector<1x1x8x4xf32>
    %78 = vector.shape_cast %77 : vector<1x1x8x4xf32> to vector<8x4xf32>
    %79 = vector.shape_cast %76 : vector<8x4xf32> to vector<1x1x8x4xf32>
    tpu.vector_store %arg4[%c0_71, %c6, %c0_72, %c0_73], %79 {strides = array<i32>} : memref<1x8x8x4xf32, #tpu.memory_space<vmem>>, vector<1x1x8x4xf32>,
    %80 = vector.extract_strided_slice %3 {offsets = [0, 56], sizes = [8, 4], strides = [1, 1]} : vector<8x96xf32> to vector<8x4xf32>
    %c0_74 = arith.constant 0 : index
    %c6_75 = arith.constant 6 : index
    %c0_76 = arith.constant 0 : index
    %c0_77 = arith.constant 0 : index
    %81 = vector.load %arg5[%c0_74, %c6_75, %c0_76, %c0_77] : memref<1x8x8x4xf32, #tpu.memory_space<vmem>>, vector<1x1x8x4xf32>
    %82 = vector.shape_cast %81 : vector<1x1x8x4xf32> to vector<8x4xf32>
    %83 = vector.shape_cast %80 : vector<8x4xf32> to vector<1x1x8x4xf32>
    tpu.vector_store %arg5[%c0_74, %c6_75, %c0_76, %c0_77], %83 {strides = array<i32>} : memref<1x8x8x4xf32, #tpu.memory_space<vmem>>, vector<1x1x8x4xf32>,
    %84 = vector.extract_strided_slice %3 {offsets = [0, 88], sizes = [8, 4], strides = [1, 1]} : vector<8x96xf32> to vector<8x4xf32>
    %c0_78 = arith.constant 0 : index
    %c6_79 = arith.constant 6 : index
    %c0_80 = arith.constant 0 : index
    %c0_81 = arith.constant 0 : index
    %85 = vector.load %arg6[%c0_78, %c6_79, %c0_80, %c0_81] : memref<1x8x8x4xf32, #tpu.memory_space<vmem>>, vector<1x1x8x4xf32>
    %86 = vector.shape_cast %85 : vector<1x1x8x4xf32> to vector<8x4xf32>
    %87 = vector.shape_cast %84 : vector<8x4xf32> to vector<1x1x8x4xf32>
    tpu.vector_store %arg6[%c0_78, %c6_79, %c0_80, %c0_81], %87 {strides = array<i32>} : memref<1x8x8x4xf32, #tpu.memory_space<vmem>>, vector<1x1x8x4xf32>,
    %88 = vector.extract_strided_slice %3 {offsets = [0, 28], sizes = [8, 4], strides = [1, 1]} : vector<8x96xf32> to vector<8x4xf32>
    %c0_82 = arith.constant 0 : index
    %c7 = arith.constant 7 : index
    %c0_83 = arith.constant 0 : index
    %c0_84 = arith.constant 0 : index
    %89 = vector.load %arg4[%c0_82, %c7, %c0_83, %c0_84] : memref<1x8x8x4xf32, #tpu.memory_space<vmem>>, vector<1x1x8x4xf32>
    %90 = vector.shape_cast %89 : vector<1x1x8x4xf32> to vector<8x4xf32>
    %91 = vector.shape_cast %88 : vector<8x4xf32> to vector<1x1x8x4xf32>
    tpu.vector_store %arg4[%c0_82, %c7, %c0_83, %c0_84], %91 {strides = array<i32>} : memref<1x8x8x4xf32, #tpu.memory_space<vmem>>, vector<1x1x8x4xf32>,
    %92 = vector.extract_strided_slice %3 {offsets = [0, 60], sizes = [8, 4], strides = [1, 1]} : vector<8x96xf32> to vector<8x4xf32>
    %c0_85 = arith.constant 0 : index
    %c7_86 = arith.constant 7 : index
    %c0_87 = arith.constant 0 : index
    %c0_88 = arith.constant 0 : index
    %93 = vector.load %arg5[%c0_85, %c7_86, %c0_87, %c0_88] : memref<1x8x8x4xf32, #tpu.memory_space<vmem>>, vector<1x1x8x4xf32>
    %94 = vector.shape_cast %93 : vector<1x1x8x4xf32> to vector<8x4xf32>
    %95 = vector.shape_cast %92 : vector<8x4xf32> to vector<1x1x8x4xf32>
    tpu.vector_store %arg5[%c0_85, %c7_86, %c0_87, %c0_88], %95 {strides = array<i32>} : memref<1x8x8x4xf32, #tpu.memory_space<vmem>>, vector<1x1x8x4xf32>,
    %96 = vector.extract_strided_slice %3 {offsets = [0, 92], sizes = [8, 4], strides = [1, 1]} : vector<8x96xf32> to vector<8x4xf32>
    %c0_89 = arith.constant 0 : index
    %c7_90 = arith.constant 7 : index
    %c0_91 = arith.constant 0 : index
    %c0_92 = arith.constant 0 : index
    %97 = vector.load %arg6[%c0_89, %c7_90, %c0_91, %c0_92] : memref<1x8x8x4xf32, #tpu.memory_space<vmem>>, vector<1x1x8x4xf32>
    %98 = vector.shape_cast %97 : vector<1x1x8x4xf32> to vector<8x4xf32>
    %99 = vector.shape_cast %96 : vector<8x4xf32> to vector<1x1x8x4xf32>
    tpu.vector_store %arg6[%c0_89, %c7_90, %c0_91, %c0_92], %99 {strides = array<i32>} : memref<1x8x8x4xf32, #tpu.memory_space<vmem>>, vector<1x1x8x4xf32>,
    return
  }
  func.func @transform_0(%arg0: i32, %arg1: i32) -> (i32, i32, i32) {
    %c0_i32 = arith.constant 0 : i32
    %c0_i32_0 = arith.constant 0 : i32
    return %arg0, %arg1, %c0_i32 : i32, i32, i32
  }
  func.func @transform_1(%arg0: i32, %arg1: i32) -> (i32, i32) {
    %c0_i32 = arith.constant 0 : i32
    %c0_i32_0 = arith.constant 0 : i32
    %c0_i32_1 = arith.constant 0 : i32
    return %c0_i32, %c0_i32_0 : i32, i32
  }
  func.func @transform_2(%arg0: i32, %arg1: i32) -> (i32, i32, i32, i32) {
    %c0_i32 = arith.constant 0 : i32
    %c0_i32_0 = arith.constant 0 : i32
    %c0_i32_1 = arith.constant 0 : i32
    return %arg0, %c0_i32, %arg1, %c0_i32_0 : i32, i32, i32, i32
  }
  func.func @transform_3(%arg0: i32, %arg1: i32) -> (i32, i32, i32, i32) {
    %c0_i32 = arith.constant 0 : i32
    %c0_i32_0 = arith.constant 0 : i32
    %c0_i32_1 = arith.constant 0 : i32
    return %arg0, %c0_i32, %arg1, %c0_i32_0 : i32, i32, i32, i32
  }
  func.func @transform_4(%arg0: i32, %arg1: i32) -> (i32, i32, i32, i32) {
    %c0_i32 = arith.constant 0 : i32
    %c0_i32_0 = arith.constant 0 : i32
    %c0_i32_1 = arith.constant 0 : i32
    return %arg0, %c0_i32, %arg1, %c0_i32_0 : i32, i32, i32, i32
  }
}

</mosaic_0001>

<llo_original>
// kernel: tpu_custom_call.1
$region0: #{tpu_custom_call.1}
  #allocation0 [shape = 'u32[]', space=smem, size = 0x4, offset = 0x4, fixed_abs, tag = 'smem constant byte address 0x4 - core index']
  #allocation1 [shape = 'u32[144,128]{1,0:T(1,128)}', space=vmem, size = 0x12000, scoped, tag = 'internal scratch']
  %s0 = inlined_call_operand.vmem [shape: f32[2,8,32], index: 0, kind: input, shape index: {}]
  %s1 = inlined_call_operand.vmem [shape: f32[96,32], index: 1, kind: input, shape index: {}]
  %s2 = inlined_call_operand.vmem [shape: f32[2,8,8,4], index: 2, kind: output, shape index: {0}]
  %s3 = inlined_call_operand.vmem [shape: f32[2,8,8,4], index: 3, kind: output, shape index: {1}]
  %s4 = inlined_call_operand.vmem [shape: f32[2,8,8,4], index: 4, kind: output, shape index: {2}]
  %5 = xla_tuple %s2, %s3, %s4
  %s6 = sld [smem:[#allocation0]]
  $region57: #{tpu_custom_call.1} parent=0
    _
  %s8 = ssub.s32 1, %s6
  %s9 = scalar_select 0, %s8, %s6
  loop: start=0, step=1, limit=4
  $region2: #{tpu_custom_call.1} parent=0 // loop_pre_header
    _
  $region3: #{tpu_custom_call.1} parent=0 // loop_header
    %s11 = sphi 0, %s15
    %p12 = scmp.ge.s32.totalorder %s11, 4
    %s18 = sphi 0, %s30
    %s19 = sphi 0, %s26
    %s20 = sphi 0, %s18
    %s21 = sphi 0, %s19
    %s22 = sphi 0, %s20
    %s23 = sphi 0, %s21
    %s35 = sphi 0, %s37
    %s38 = sphi 0, %s35
    %s39 = sphi 0, %s38
    %s55 = sphi 0, %s39
    %s59 = sphi 0, %s59
    %s61 = sphi 0, %s59
    %s62 = sphi 0, %s61
    %s76 = sphi 0, %s62
    %s84 = sphi 0, %s86
    %s87 = sphi 0, %s84
    %s88 = sphi 0, %s87
    %s104 = sphi 0, %s88
    %s112 = sphi 0, %s114
    %s115 = sphi 0, %s112
    %s116 = sphi 0, %s115
    %s132 = sphi 0, %s116
    %s140 = sphi 0, %s142
    %s143 = sphi 0, %s140
    %s144 = sphi 0, %s143
    %s160 = sphi 0, %s144
  $region4: #{tpu_custom_call.1} parent=0 // loop_header_branch
    %14 = sbr.rel (%p12) target = $region8
  $region5: #{tpu_custom_call.1} parent=0 // loop_body
    %s16 = ssub.s32 %s11, 1
    %s17 = ssub.s32 %s11, 2
    %s24 = sadd.s32 1, %s19
    %p25 = scmp.ge.s32.totalorder %s24, 1
    %s26 = scalar_select %p25, 0, %s24
    %s27 = sadd.s32 1, %s18
    %s28 = scalar_select %p25, %s27, %s18
    %p29 = scmp.ge.s32.totalorder %s28, 2
    %s30 = scalar_select %p29, 0, %s28
    %s31 = ssub.s32 %s18, %s30
    %s32 = ssub.s32 %s19, %s26
    %s33 = sor.u32 %s31, %s32
    %p34 = scmp.eq.s32.totalorder %s33, 0
    %s36 = sadd.s32 %s35, 1
    %s37 = scalar_select %p34, %s35, %s36
    %p40 = pneg %p34
    %p41 = scmp.eq.s32.totalorder %s11, 1
    %p42 = por %p40, %p41
    %p43 = scmp.ne.s32.totalorder %s35, %s38
    %p44 = scmp.eq.s32.totalorder %s11, 0
    %p45 = por %p43, %p44
    %p46 = scmp.ne.s32.totalorder %s35, %s38
    %p47 = scmp.eq.s32.totalorder %s16, 1
    %p48 = por %p46, %p47
    %p49 = scmp.ne.s32.totalorder %s38, %s39
    %p50 = scmp.eq.s32.totalorder %s16, 0
    %p51 = por %p49, %p50
    %p52 = scmp.ne.s32.totalorder %s38, %s39
    %p53 = scmp.eq.s32.totalorder %s17, 1
    %p54 = por %p52, %p53
    %p56 = scmp.ne.s32.totalorder %s39, %s55
    %p57 = scmp.eq.s32.totalorder %s17, 0
    %p58 = por %p56, %p57
    %s60 = sadd.s32 %s59, 1
    %p63 = scmp.eq.s32.totalorder %s11, 1
    %p64 = scmp.ne.s32.totalorder %s59, %s61
    %p65 = scmp.eq.s32.totalorder %s11, 0
    %p66 = por %p64, %p65
    %p67 = scmp.ne.s32.totalorder %s59, %s61
    %p68 = scmp.eq.s32.totalorder %s16, 1
    %p69 = por %p67, %p68
    %p70 = scmp.ne.s32.totalorder %s61, %s62
    %p71 = scmp.eq.s32.totalorder %s16, 0
    %p72 = por %p70, %p71
    %p73 = scmp.ne.s32.totalorder %s61, %s62
    %p74 = scmp.eq.s32.totalorder %s17, 1
    %p75 = por %p73, %p74
    %p77 = scmp.ne.s32.totalorder %s62, %s76
    %p78 = scmp.eq.s32.totalorder %s17, 0
    %p79 = por %p77, %p78
    %s80 = ssub.s32 %s18, %s30
    %s81 = ssub.s32 %s19, %s26
    %s82 = sor.u32 %s80, %s81
    %p83 = scmp.eq.s32.totalorder %s82, 0
    %s85 = sadd.s32 %s84, 1
    %s86 = scalar_select %p83, %s84, %s85
    %p89 = pneg %p83
    %p90 = scmp.eq.s32.totalorder %s11, 1
    %p91 = por %p89, %p90
    %p92 = scmp.ne.s32.totalorder %s84, %s87
    %p93 = scmp.eq.s32.totalorder %s11, 0
    %p94 = por %p92, %p93
    %p95 = scmp.ne.s32.totalorder %s84, %s87
    %p96 = scmp.eq.s32.totalorder %s16, 1
    %p97 = por %p95, %p96
    %p98 = scmp.ne.s32.totalorder %s87, %s88
    %p99 = scmp.eq.s32.totalorder %s16, 0
    %p100 = por %p98, %p99
    %p101 = scmp.ne.s32.totalorder %s87, %s88
    %p102 = scmp.eq.s32.totalorder %s17, 1
    %p103 = por %p101, %p102
    %p105 = scmp.ne.s32.totalorder %s88, %s104
    %p106 = scmp.eq.s32.totalorder %s17, 0
    %p107 = por %p105, %p106
    %s108 = ssub.s32 %s18, %s30
    %s109 = ssub.s32 %s19, %s26
    %s110 = sor.u32 %s108, %s109
    %p111 = scmp.eq.s32.totalorder %s110, 0
    %s113 = sadd.s32 %s112, 1
    %s114 = scalar_select %p111, %s112, %s113
    %p117 = pneg %p111
    %p118 = scmp.eq.s32.totalorder %s11, 1
    %p119 = por %p117, %p118
    %p120 = scmp.ne.s32.totalorder %s112, %s115
    %p121 = scmp.eq.s32.totalorder %s11, 0
    %p122 = por %p120, %p121
    %p123 = scmp.ne.s32.totalorder %s112, %s115
    %p124 = scmp.eq.s32.totalorder %s16, 1
    %p125 = por %p123, %p124
    %p126 = scmp.ne.s32.totalorder %s115, %s116
    %p127 = scmp.eq.s32.totalorder %s16, 0
    %p128 = por %p126, %p127
    %p129 = scmp.ne.s32.totalorder %s115, %s116
    %p130 = scmp.eq.s32.totalorder %s17, 1
    %p131 = por %p129, %p130
    %p133 = scmp.ne.s32.totalorder %s116, %s132
    %p134 = scmp.eq.s32.totalorder %s17, 0
    %p135 = por %p133, %p134
    %s136 = ssub.s32 %s18, %s30
    %s137 = ssub.s32 %s19, %s26
    %s138 = sor.u32 %s136, %s137
    %p139 = scmp.eq.s32.totalorder %s138, 0
    %s141 = sadd.s32 %s140, 1
    %s142 = scalar_select %p139, %s140, %s141
    %p145 = pneg %p139
    %p146 = scmp.eq.s32.totalorder %s11, 1
    %p147 = por %p145, %p146
    %p148 = scmp.ne.s32.totalorder %s140, %s143
    %p149 = scmp.eq.s32.totalorder %s11, 0
    %p150 = por %p148, %p149
    %p151 = scmp.ne.s32.totalorder %s140, %s143
    %p152 = scmp.eq.s32.totalorder %s16, 1
    %p153 = por %p151, %p152
    %p154 = scmp.ne.s32.totalorder %s143, %s144
    %p155 = scmp.eq.s32.totalorder %s16, 0
    %p156 = por %p154, %p155
    %p157 = scmp.ne.s32.totalorder %s143, %s144
    %p158 = scmp.eq.s32.totalorder %s17, 1
    %p159 = por %p157, %p158
    %p161 = scmp.ne.s32.totalorder %s144, %s160
    %p162 = scmp.eq.s32.totalorder %s17, 0
    %p163 = por %p161, %p162
    %p164 = scmp.le.s32.totalorder 1, %s11
    %p165 = scmp.lt.s32.totalorder %s11, 3
    %p166 = pnand %p164, %p165
    %p167 = pneg %p166
    // Predicated region
    $region9: #{tpu_custom_call.1} parent=5 // pred_check
      _
    $region10: #{tpu_custom_call.1} parent=5 // pred_check_branch
      %169 = sbr.rel (%p166) target = $region12
    $region11: #{tpu_custom_call.1} parent=5 // pred_region
      %s170 = ssub.s32 %s11, 1
      // Predicated region
      $region13: #{tpu_custom_call.1} parent=11 // pred_check
        %p171 = pneg %p72
      $region14: #{tpu_custom_call.1} parent=11 // pred_check_branch
        %173 = sbr.rel (%p171) target = $region16
      $region15: #{tpu_custom_call.1} parent=11 // pred_region
        _
      $region16: #{tpu_custom_call.1} parent=11 // pred_fallthru
        _
    $region12: #{tpu_custom_call.1} parent=5 // pred_fallthru
      _
    %p174 = scmp.lt.s32.totalorder %s11, 2
    // Predicated region
    $region17: #{tpu_custom_call.1} parent=5 // pred_check
      %p175 = pneg %p174
    $region18: #{tpu_custom_call.1} parent=5 // pred_check_branch
      %177 = sbr.rel (%p175) target = $region20
    $region19: #{tpu_custom_call.1} parent=5 // pred_region
      // Predicated region
      $region21: #{tpu_custom_call.1} parent=19 // pred_check
        %p178 = pneg %p45
      $region22: #{tpu_custom_call.1} parent=19 // pred_check_branch
        %180 = sbr.rel (%p178) target = $region24
      $region23: #{tpu_custom_call.1} parent=19 // pred_region
        %p181 = scmp.lt.s32.totalorder %s18, 1
        %s182 = scalar_select %p181, %s18, 1
        %p183 = scmp.lt.s32.totalorder %s19, 0
        %s184 = scalar_select %p183, %s19, 0
        %s185 = sadd.s32 %s184, %s182
        %s186 = smul.addr %s185, 8
        %s187 = scalar_lea.vmem %s0, %s186
      $region24: #{tpu_custom_call.1} parent=19 // pred_fallthru
        _
    $region20: #{tpu_custom_call.1} parent=5 // pred_fallthru
      _
    %p188 = scmp.le.s32.totalorder 1, %s11
    %p189 = scmp.lt.s32.totalorder %s11, 3
    %p190 = pnand %p188, %p189
    %p191 = pneg %p190
    // Predicated region
    $region25: #{tpu_custom_call.1} parent=5 // pred_check
      _
    $region26: #{tpu_custom_call.1} parent=5 // pred_check_branch
      %193 = sbr.rel (%p190) target = $region28
    $region27: #{tpu_custom_call.1} parent=5 // pred_region
      %s194 = ssub.s32 %s11, 1
      %p195 = scmp.lt.s32.totalorder %s20, 1
      %s196 = scalar_select %p195, %s20, 1
      %p197 = scmp.lt.s32.totalorder %s21, 0
      %s198 = scalar_select %p197, %s21, 0
      %s199 = sadd.s32 %s198, %s196
      %s200 = smul.addr %s199, 8
      %s201 = scalar_lea.vmem %s0, %s200
      %p202 = pneg %p51
      %p203 = pneg %p48
      %p204 = pneg %p72
      %p205 = pneg %p69
      %p206 = pneg %p100
      %p207 = pneg %p97
      %p208 = scmp.lt.s32.totalorder %s20, 1
      %s209 = scalar_select %p208, %s20, 1
      %p210 = scmp.lt.s32.totalorder %s21, 0
      %s211 = scalar_select %p210, %s21, 0
      %s212 = smul.addr %s209, 8
      %s213 = sadd.s32 %s211, %s212
      %s214 = smul.addr %s213, 8
      %s215 = scalar_lea.vmem %s2, %s214
      %p216 = pneg %p128
      %p217 = pneg %p125
      %p218 = scmp.lt.s32.totalorder %s20, 1
      %s219 = scalar_select %p218, %s20, 1
      %p220 = scmp.lt.s32.totalorder %s21, 0
      %s221 = scalar_select %p220, %s21, 0
      %s222 = smul.addr %s219, 8
      %s223 = sadd.s32 %s221, %s222
      %s224 = smul.addr %s223, 8
      %s225 = scalar_lea.vmem %s3, %s224
      %p226 = pneg %p156
      %p227 = pneg %p153
      %p228 = scmp.lt.s32.totalorder %s20, 1
      %s229 = scalar_select %p228, %s20, 1
      %p230 = scmp.lt.s32.totalorder %s21, 0
      %s231 = scalar_select %p230, %s21, 0
      %s232 = smul.addr %s229, 8
      %s233 = sadd.s32 %s231, %s232
      %s234 = smul.addr %s233, 8
      %s235 = scalar_lea.vmem %s4, %s234
      %p236 = scmp.lt.s32.totalorder %s20, 1
      %s237 = scalar_select %p236, %s20, 1
      %p238 = scmp.lt.s32.totalorder %s21, 0
      %s239 = scalar_select %p238, %s21, 0
      %s240 = sadd.s32 %s239, %s237
      %s241 = smul.addr %s240, 8
      %s242 = scalar_lea.vmem %s0, %s241
      %p243 = scmp.lt.s32.totalorder %s20, 1
      %s244 = scalar_select %p243, %s20, 1
      %p245 = scmp.lt.s32.totalorder %s21, 0
      %s246 = scalar_select %p245, %s21, 0
      %s247 = smul.addr %s244, 8
      %s248 = sadd.s32 %s246, %s247
      %s249 = smul.addr %s248, 8
      %s250 = scalar_lea.vmem %s2, %s249
      %p251 = scmp.lt.s32.totalorder %s20, 1
      %s252 = scalar_select %p251, %s20, 1
      %p253 = scmp.lt.s32.totalorder %s21, 0
      %s254 = scalar_select %p253, %s21, 0
      %s255 = smul.addr %s252, 8
      %s256 = sadd.s32 %s254, %s255
      %s257 = smul.addr %s256, 8
      %s258 = scalar_lea.vmem %s3, %s257
      %p259 = scmp.lt.s32.totalorder %s20, 1
      %s260 = scalar_select %p259, %s20, 1
      %p261 = scmp.lt.s32.totalorder %s21, 0
      %s262 = scalar_select %p261, %s21, 0
      %s263 = smul.addr %s260, 8
      %s264 = sadd.s32 %s262, %s263
      %s265 = smul.addr %s264, 8
      %s266 = scalar_lea.vmem %s4, %s265
      %v267 = vld [vmem:[%s242] sm:$0xff]
      %v268 = vld [vmem:[%s1] sm:$0xff]
      %v269 = vld [vmem:[%s1 + $0x8] sm:$0xff]
      %v270 = vld [vmem:[%s1 + $0x10] sm:$0xff]
      %v271 = vld [vmem:[%s1 + $0x18] sm:$0xff]
      %v272 = vld [vmem:[%s1 + $0x20] sm:$0xff]
      %v273 = vld [vmem:[%s1 + $0x28] sm:$0xff]
      %v274 = vld [vmem:[%s1 + $0x30] sm:$0xff]
      %v275 = vld [vmem:[%s1 + $0x38] sm:$0xff]
      %v276 = vld [vmem:[%s1 + $0x40] sm:$0xff]
      %v277 = vld [vmem:[%s1 + $0x48] sm:$0xff]
      %v278 = vld [vmem:[%s1 + $0x50] sm:$0xff]
      %v279 = vld [vmem:[%s1 + $0x58] sm:$0xff]
      %vm280 = vcmask 261120
      %v282 = vsel %vm280, %v267, 0
      %v285 = vsel %vm280, %v268, 0
      %v288 = vsel %vm280, %v269, 0
      %v291 = vsel %vm280, %v270, 0
      %v294 = vsel %vm280, %v271, 0
      %v297 = vsel %vm280, %v272, 0
      %v300 = vsel %vm280, %v273, 0
      %v303 = vsel %vm280, %v274, 0
      %v306 = vsel %vm280, %v275, 0
      %v309 = vsel %vm280, %v276, 0
      %v312 = vsel %vm280, %v277, 0
      %v315 = vsel %vm280, %v278, 0
      %v318 = vsel %vm280, %v279, 0
      %320 = vmatprep.subr.mxu0 0.0
      %321 = vmatpush1.xpose.msra.mxu0 %v285
      %322 = vmatprep.subr.mxu0 0.0
      %323 = vmatpush1.xpose.msra.mxu0 %v288
      %324 = vmatprep.subr.mxu0 0.0
      %325 = vmatpush1.xpose.msra.mxu0 %v291
      %326 = vmatprep.subr.mxu0 0.0
      %327 = vmatpush1.xpose.msra.mxu0 %v294
      %328 = vmatprep.subr.mxu0 0.0
      %329 = vmatpush1.xpose.msra.mxu0 %v297
      %330 = vmatprep.subr.mxu0 0.0
      %331 = vmatpush1.xpose.msra.mxu0 %v300
      %332 = vmatprep.subr.mxu0 0.0
      %333 = vmatpush1.xpose.msra.mxu0 %v303
      %334 = vmatprep.subr.mxu0 0.0
      %335 = vmatpush1.xpose.msra.mxu0 %v306
      %336 = vmatprep.subr.mxu0 0.0
      %337 = vmatpush1.xpose.msra.mxu0 %v309
      %338 = vmatprep.subr.mxu0 0.0
      %339 = vmatpush1.xpose.msra.mxu0 %v312
      %340 = vmatprep.subr.mxu0 0.0
      %341 = vmatpush1.xpose.msra.mxu0 %v315
      %342 = vmatprep.subr.mxu0 0.0
      %343 = vmatpush1.xpose.msra.mxu0 %v318
      %344 = vmatprep.subr.mxu0 0.0
      %345 = vmatpush1.xpose.msra.mxu0 0.0
      %346 = vmatprep.subr.mxu0 0.0
      %347 = vmatpush1.xpose.msra.mxu0 0.0
      %348 = vmatprep.subr.mxu0 0.0
      %349 = vmatpush1.xpose.msra.mxu0 0.0
      %350 = vmatprep.subr.mxu0 0.0
      %351 = vmatpush1.xpose.msra.mxu0 0.0
      %352 = vmatprep.subr.mxu0 0.0
      %353 = vmatpush1.xpose.msra.mxu0 0.0
      %354 = vmatprep.subr.mxu0 0.0
      %355 = vmatpush1.xpose.msra.mxu0 0.0
      %356 = vmatprep.subr.mxu0 0.0
      %357 = vmatpush1.xpose.msra.mxu0 0.0
      %358 = vmatprep.subr.mxu0 0.0
      %359 = vmatpush1.xpose.msra.mxu0 0.0
      %360 = vmatprep.subr.mxu0 0.0
      %361 = vmatpush1.xpose.msra.mxu0 0.0
      %362 = vmatprep.subr.mxu0 0.0
      %363 = vmatpush1.xpose.msra.mxu0 0.0
      %364 = vmatprep.subr.mxu0 0.0
      %365 = vmatpush1.xpose.msra.mxu0 0.0
      %366 = vmatprep.subr.mxu0 0.0
      %367 = vmatpush1.xpose.msra.mxu0 0.0
      %368 = vmatprep.subr.mxu0 0.0
      %369 = vmatpush1.xpose.msra.mxu0 0.0
      %370 = vmatprep.subr.mxu0 0.0
      %371 = vmatpush1.xpose.msra.mxu0 0.0
      %372 = vmatprep.subr.mxu0 0.0
      %373 = vmatpush1.xpose.msra.mxu0 0.0
      %374 = vmatprep.subr.mxu0 0.0
      %375 = vmatpush1.xpose.msra.mxu0 0.0
      %376 = vmatprep.subr.mxu0 0.0
      %377 = vmatpush1.xpose.msra.mxu0 0.0
      %378 = vmatprep.subr.mxu0 0.0
      %379 = vmatpush1.xpose.msra.mxu0 0.0
      %380 = vmatprep.subr.mxu0 0.0
      %381 = vmatpush1.xpose.msra.mxu0 0.0
      %382 = vmatprep.subr.mxu0 0.0
      %383 = vmatpush1.xpose.msra.mxu0 0.0
      %384 = vmatprep.mubr.f32.mxu0 0.0
      %385 = vmatmul.mubr.f32.gmra.mrb[0].mxu0 %v282
      %v386 = vpop.f32.mrb[0].mxu0
      %v387 = vadd.f32 0.0, %v386
      %v388 = vpop.f32.mrb[0].mxu0
      %389 = vdwg.mxu0
      %vm390 = vcmask 31744
      %391 = vst.msk [vmem:[%s250] sm:$0xff] %vm390, %v387
      %393 = vrot.lane.b32.xlu0 %v387, 96
      %v394 = vpop.permute.xlu0 %393
      %396 = vst.msk [vmem:[%s258] sm:$0xff] %vm390, %v394
      %397 = vrot.lane.b32.xlu0 %v387, 64
      %v398 = vpop.permute.xlu0 %397
      %400 = vst.msk [vmem:[%s266] sm:$0xff] %vm390, %v398
      %401 = vrot.lane.b32.xlu0 %v387, 124
      %v402 = vpop.permute.xlu0 %401
      %s404 = scalar_lea.vmem %s250, 8
      %405 = vst.msk [vmem:[%s404] sm:$0xff] %vm390, %v402
      %406 = vrot.lane.b32.xlu0 %v387, 92
      %v407 = vpop.permute.xlu0 %406
      %s409 = scalar_lea.vmem %s258, 8
      %410 = vst.msk [vmem:[%s409] sm:$0xff] %vm390, %v407
      %411 = vrot.lane.b32.xlu0 %v387, 60
      %v412 = vpop.permute.xlu0 %411
      %s414 = scalar_lea.vmem %s266, 8
      %415 = vst.msk [vmem:[%s414] sm:$0xff] %vm390, %v412
      %416 = vrot.lane.b32.xlu0 %v387, 120
      %v417 = vpop.permute.xlu0 %416
      %s419 = scalar_lea.vmem %s250, 16
      %420 = vst.msk [vmem:[%s419] sm:$0xff] %vm390, %v417
      %421 = vrot.lane.b32.xlu0 %v387, 88
      %v422 = vpop.permute.xlu0 %421
      %s424 = scalar_lea.vmem %s258, 16
      %425 = vst.msk [vmem:[%s424] sm:$0xff] %vm390, %v422
      %426 = vrot.lane.b32.xlu0 %v387, 56
      %v427 = vpop.permute.xlu0 %426
      %s429 = scalar_lea.vmem %s266, 16
      %430 = vst.msk [vmem:[%s429] sm:$0xff] %vm390, %v427
      %431 = vrot.lane.b32.xlu0 %v387, 116
      %v432 = vpop.permute.xlu0 %431
      %s434 = scalar_lea.vmem %s250, 24
      %435 = vst.msk [vmem:[%s434] sm:$0xff] %vm390, %v432
      %436 = vrot.lane.b32.xlu0 %v387, 84
      %v437 = vpop.permute.xlu0 %436
      %s439 = scalar_lea.vmem %s258, 24
      %440 = vst.msk [vmem:[%s439] sm:$0xff] %vm390, %v437
      %441 = vrot.lane.b32.xlu0 %v387, 52
      %v442 = vpop.permute.xlu0 %441
      %s444 = scalar_lea.vmem %s266, 24
      %445 = vst.msk [vmem:[%s444] sm:$0xff] %vm390, %v442
      %446 = vrot.lane.b32.xlu0 %v387, 112
      %v447 = vpop.permute.xlu0 %446
      %s449 = scalar_lea.vmem %s250, 32
      %450 = vst.msk [vmem:[%s449] sm:$0xff] %vm390, %v447
      %451 = vrot.lane.b32.xlu0 %v387, 80
      %v452 = vpop.permute.xlu0 %451
      %s454 = scalar_lea.vmem %s258, 32
      %455 = vst.msk [vmem:[%s454] sm:$0xff] %vm390, %v452
      %456 = vrot.lane.b32.xlu0 %v387, 48
      %v457 = vpop.permute.xlu0 %456
      %s459 = scalar_lea.vmem %s266, 32
      %460 = vst.msk [vmem:[%s459] sm:$0xff] %vm390, %v457
      %461 = vrot.lane.b32.xlu0 %v387, 108
      %v462 = vpop.permute.xlu0 %461
      %s464 = scalar_lea.vmem %s250, 40
      %465 = vst.msk [vmem:[%s464] sm:$0xff] %vm390, %v462
      %466 = vrot.lane.b32.xlu0 %v387, 76
      %v467 = vpop.permute.xlu0 %466
      %s469 = scalar_lea.vmem %s258, 40
      %470 = vst.msk [vmem:[%s469] sm:$0xff] %vm390, %v467
      %471 = vrot.lane.b32.xlu0 %v387, 44
      %v472 = vpop.permute.xlu0 %471
      %s474 = scalar_lea.vmem %s266, 40
      %475 = vst.msk [vmem:[%s474] sm:$0xff] %vm390, %v472
      %476 = vrot.lane.b32.xlu0 %v387, 104
      %v477 = vpop.permute.xlu0 %476
      %s479 = scalar_lea.vmem %s250, 48
      %480 = vst.msk [vmem:[%s479] sm:$0xff] %vm390, %v477
      %481 = vrot.lane.b32.xlu0 %v387, 72
      %v482 = vpop.permute.xlu0 %481
      %s484 = scalar_lea.vmem %s258, 48
      %485 = vst.msk [vmem:[%s484] sm:$0xff] %vm390, %v482
      %486 = vrot.lane.b32.xlu0 %v387, 40
      %v487 = vpop.permute.xlu0 %486
      %s489 = scalar_lea.vmem %s266, 48
      %490 = vst.msk [vmem:[%s489] sm:$0xff] %vm390, %v487
      %491 = vrot.lane.b32.xlu0 %v387, 100
      %v492 = vpop.permute.xlu0 %491
      %s494 = scalar_lea.vmem %s250, 56
      %495 = vst.msk [vmem:[%s494] sm:$0xff] %vm390, %v492
      %496 = vrot.lane.b32.xlu0 %v387, 68
      %v497 = vpop.permute.xlu0 %496
      %s499 = scalar_lea.vmem %s258, 56
      %500 = vst.msk [vmem:[%s499] sm:$0xff] %vm390, %v497
      %501 = vrot.lane.b32.xlu0 %v387, 36
      %v502 = vpop.permute.xlu0 %501
      %s504 = scalar_lea.vmem %s266, 56
      %505 = vst.msk [vmem:[%s504] sm:$0xff] %vm390, %v502
      %p506 = scmp.lt.s32.totalorder %s20, 1
      %s507 = scalar_select %p506, %s20, 1
      %p508 = scmp.lt.s32.totalorder %s21, 0
      %s509 = scalar_select %p508, %s21, 0
      %s510 = smul.addr %s507, 8
      %s511 = sadd.s32 %s509, %s510
      %s512 = smul.addr %s511, 8
      %s513 = scalar_lea.vmem %s2, %s512
      %p514 = scmp.lt.s32.totalorder %s20, 1
      %s515 = scalar_select %p514, %s20, 1
      %p516 = scmp.lt.s32.totalorder %s21, 0
      %s517 = scalar_select %p516, %s21, 0
      %s518 = smul.addr %s515, 8
      %s519 = sadd.s32 %s517, %s518
      %s520 = smul.addr %s519, 8
      %s521 = scalar_lea.vmem %s3, %s520
      %p522 = scmp.lt.s32.totalorder %s20, 1
      %s523 = scalar_select %p522, %s20, 1
      %p524 = scmp.lt.s32.totalorder %s21, 0
      %s525 = scalar_select %p524, %s21, 0
      %s526 = smul.addr %s523, 8
      %s527 = sadd.s32 %s525, %s526
      %s528 = smul.addr %s527, 8
      %s529 = scalar_lea.vmem %s4, %s528
      // Predicated region
      $region29: #{tpu_custom_call.1} parent=27 // pred_check
        %p530 = pneg %p97
      $region30: #{tpu_custom_call.1} parent=27 // pred_check_branch
        %532 = sbr.rel (%p530) target = $region32
      $region31: #{tpu_custom_call.1} parent=27 // pred_region
        _
      $region32: #{tpu_custom_call.1} parent=27 // pred_fallthru
        _
      // Predicated region
      $region33: #{tpu_custom_call.1} parent=27 // pred_check
        %p533 = pneg %p125
      $region34: #{tpu_custom_call.1} parent=27 // pred_check_branch
        %535 = sbr.rel (%p533) target = $region36
      $region35: #{tpu_custom_call.1} parent=27 // pred_region
        _
      $region36: #{tpu_custom_call.1} parent=27 // pred_fallthru
        _
      // Predicated region
      $region37: #{tpu_custom_call.1} parent=27 // pred_check
        %p536 = pneg %p153
      $region38: #{tpu_custom_call.1} parent=27 // pred_check_branch
        %538 = sbr.rel (%p536) target = $region40
      $region39: #{tpu_custom_call.1} parent=27 // pred_region
        _
      $region40: #{tpu_custom_call.1} parent=27 // pred_fallthru
        _
    $region28: #{tpu_custom_call.1} parent=5 // pred_fallthru
      _
    %p539 = scmp.le.s32.totalorder 2, %s11
    // Predicated region
    $region41: #{tpu_custom_call.1} parent=5 // pred_check
      %p540 = pneg %p539
    $region42: #{tpu_custom_call.1} parent=5 // pred_check_branch
      %542 = sbr.rel (%p540) target = $region44
    $region43: #{tpu_custom_call.1} parent=5 // pred_region
      %s543 = ssub.s32 %s11, 2
      // Predicated region
      $region45: #{tpu_custom_call.1} parent=43 // pred_check
        %p544 = pneg %p103
      $region46: #{tpu_custom_call.1} parent=43 // pred_check_branch
        %546 = sbr.rel (%p544) target = $region48
      $region47: #{tpu_custom_call.1} parent=43 // pred_region
        %p547 = scmp.lt.s32.totalorder %s22, 1
        %s548 = scalar_select %p547, %s22, 1
        %p549 = scmp.lt.s32.totalorder %s23, 0
        %s550 = scalar_select %p549, %s23, 0
        %s551 = smul.addr %s548, 8
        %s552 = sadd.s32 %s550, %s551
        %s553 = smul.addr %s552, 8
        %s554 = scalar_lea.vmem %s2, %s553
      $region48: #{tpu_custom_call.1} parent=43 // pred_fallthru
        _
      // Predicated region
      $region49: #{tpu_custom_call.1} parent=43 // pred_check
        %p555 = pneg %p131
      $region50: #{tpu_custom_call.1} parent=43 // pred_check_branch
        %557 = sbr.rel (%p555) target = $region52
      $region51: #{tpu_custom_call.1} parent=43 // pred_region
        %p558 = scmp.lt.s32.totalorder %s22, 1
        %s559 = scalar_select %p558, %s22, 1
        %p560 = scmp.lt.s32.totalorder %s23, 0
        %s561 = scalar_select %p560, %s23, 0
        %s562 = smul.addr %s559, 8
        %s563 = sadd.s32 %s561, %s562
        %s564 = smul.addr %s563, 8
        %s565 = scalar_lea.vmem %s3, %s564
      $region52: #{tpu_custom_call.1} parent=43 // pred_fallthru
        _
      // Predicated region
      $region53: #{tpu_custom_call.1} parent=43 // pred_check
        %p566 = pneg %p159
      $region54: #{tpu_custom_call.1} parent=43 // pred_check_branch
        %568 = sbr.rel (%p566) target = $region56
      $region55: #{tpu_custom_call.1} parent=43 // pred_region
        %p569 = scmp.lt.s32.totalorder %s22, 1
        %s570 = scalar_select %p569, %s22, 1
        %p571 = scmp.lt.s32.totalorder %s23, 0
        %s572 = scalar_select %p571, %s23, 0
        %s573 = smul.addr %s570, 8
        %s574 = sadd.s32 %s572, %s573
        %s575 = smul.addr %s574, 8
        %s576 = scalar_lea.vmem %s4, %s575
      $region56: #{tpu_custom_call.1} parent=43 // pred_fallthru
        _
    $region44: #{tpu_custom_call.1} parent=5 // pred_fallthru
      _
  $region6: #{tpu_custom_call.1} parent=0 // loop_footer
    %s15 = sadd.s32 1, %s11
  $region7: #{tpu_custom_call.1} parent=0 // loop_footer_branch
    %10 = sbr.rel target = $region3
  $region8: #{tpu_custom_call.1} parent=0 // loop_exit
    _

</llo_original>
